<compile_context>
chip_gen: v6e
topology: v6e:2x2x1
jax: 0.10.0
libtpu: 0.0.40
codegen_flags: <defaults>
</compile_context>

<pallas_src>
import functools

import jax
import jax.numpy as jnp
from jax.experimental import pallas as pl
from jax.experimental.pallas import tpu as pltpu


# Set to jnp.bfloat16 to hit the bf16 MXU fast path on v6e/v7x (accumulation
# stays f32 via preferred_element_type). Kept f32 here to match the reference
# module's numerics.
MATMUL_DTYPE = jnp.float32

MAX_ROW_TILE = 256          # rows per grid step (multiple of 8 and of 128)
LN_EPS = 1e-5               # PyTorch nn.LayerNorm default


def _round_up(x, m):
    return (x + m - 1) // m * m


def _row_tiling(M):
    """Pick a big row tile; pad M so the grid divides evenly."""
    if M <= MAX_ROW_TILE:
        tm = _round_up(M, 8)
        return tm, tm
    return MAX_ROW_TILE, _round_up(M, MAX_ROW_TILE)


def _col_tiling(N):
    """Tile N into 128/256-wide lane-aligned blocks when it is large."""
    if N > 512 and N % 128 == 0:
        return (256 if N % 256 == 0 else 128), N
    # TODO(synk): pad-and-tile N (and add a K grid axis with a VMEM f32
    # accumulator) for very large / unaligned weights so a single (K, N)
    # weight block never has to be VMEM-resident.
    return N, N


# ----------------------------- Pallas kernels -----------------------------

def _make_linear_kernel(has_ln, has_bias, activation, has_residual):
    """y = [LayerNorm(x)] @ w (+ b) [GELU] (+ residual)."""

    def kernel(*refs):
        idx = 0
        x_ref = refs[idx]; idx += 1
        if has_ln:
            g_ref = refs[idx]; be_ref = refs[idx + 1]; idx += 2
        w_ref = refs[idx]; idx += 1
        if has_bias:
            b_ref = refs[idx]; idx += 1
        if has_residual:
            r_ref = refs[idx]; idx += 1
        o_ref = refs[idx]

        x = x_ref[...].astype(jnp.float32)
        if has_ln:
            mu = jnp.mean(x, axis=-1, keepdims=True)
            var = jnp.mean(jnp.square(x - mu), axis=-1, keepdims=True)
            x = (x - mu) * jax.lax.rsqrt(var + LN_EPS)
            x = x * g_ref[...] + be_ref[...]
        acc = jnp.dot(x.astype(MATMUL_DTYPE), w_ref[...].astype(MATMUL_DTYPE),
                      preferred_element_type=jnp.float32)
        if has_bias:
            acc = acc + b_ref[...]
        if activation == "gelu":            # exact erf-GELU == nn.GELU() default
            acc = 0.5 * acc * (1.0 + jax.lax.erf(acc * (2.0 ** -0.5)))
        if has_residual:
            acc = acc + r_ref[...].astype(jnp.float32)
        o_ref[...] = acc.astype(o_ref.dtype)

    return kernel


def linear_pallas(x, w, b=None, ln=None, activation=None, residual=None):
    """y = [LN(x)] @ w (+ b) [GELU] (+ residual).
    x:[M,K], w:[K,N] pre-transposed, b:[N]|None, residual:[M,N]|None,
    ln: optional (gamma, beta) fused LayerNorm over the K features of x."""
    M, K = x.shape
    N = w.shape[1]
    tm, Mp = _row_tiling(M)
    tn, _ = _col_tiling(N)

    xp = x if Mp == M else jnp.pad(x, ((0, Mp - M), (0, 0)))

    operands = [xp]
    in_specs = [pl.BlockSpec((tm, K), lambda i, j: (i, 0))]
    if ln is not None:
        gamma, beta = ln
        operands += [gamma.reshape(1, K).astype(jnp.float32),
                     beta.reshape(1, K).astype(jnp.float32)]
        in_specs += [pl.BlockSpec((1, K), lambda i, j: (0, 0)),
                     pl.BlockSpec((1, K), lambda i, j: (0, 0))]
    operands.append(w)
    in_specs.append(pl.BlockSpec((K, tn), lambda i, j: (0, j)))
    if b is not None:
        operands.append(b.reshape(1, N).astype(jnp.float32))
        in_specs.append(pl.BlockSpec((1, tn), lambda i, j: (0, j)))
    if residual is not None:
        rp = residual if Mp == M else jnp.pad(residual, ((0, Mp - M), (0, 0)))
        operands.append(rp)
        in_specs.append(pl.BlockSpec((tm, tn), lambda i, j: (i, j)))

    kernel = _make_linear_kernel(ln is not None, b is not None, activation,
                                 residual is not None)
    out = pl.pallas_call(
        kernel,
        out_shape=jax.ShapeDtypeStruct((Mp, N), x.dtype),
        grid=(Mp // tm, N // tn),
        in_specs=in_specs,
        out_specs=pl.BlockSpec((tm, tn), lambda i, j: (i, j)),
        compiler_params=pltpu.CompilerParams(
            dimension_semantics=("parallel", "parallel")),
    )(*operands)
    return out[:M] if Mp != M else out


def _layernorm_kernel(x_ref, g_ref, b_ref, o_ref):
    x = x_ref[...].astype(jnp.float32)
    mu = jnp.mean(x, axis=-1, keepdims=True)
    var = jnp.mean(jnp.square(x - mu), axis=-1, keepdims=True)
    y = (x - mu) * jax.lax.rsqrt(var + LN_EPS)
    o_ref[...] = (y * g_ref[...] + b_ref[...]).astype(o_ref.dtype)


def layernorm_pallas(x, gamma, beta):
    M, D = x.shape
    tm, Mp = _row_tiling(M)
    xp = x if Mp == M else jnp.pad(x, ((0, Mp - M), (0, 0)))
    out = pl.pallas_call(
        _layernorm_kernel,
        out_shape=jax.ShapeDtypeStruct((Mp, D), x.dtype),
        grid=(Mp // tm,),
        in_specs=[pl.BlockSpec((tm, D), lambda i: (i, 0)),
                  pl.BlockSpec((1, D), lambda i: (0, 0)),
                  pl.BlockSpec((1, D), lambda i: (0, 0))],
        out_specs=pl.BlockSpec((tm, D), lambda i: (i, 0)),
        compiler_params=pltpu.CompilerParams(dimension_semantics=("parallel",)),
    )(xp, gamma.reshape(1, D).astype(jnp.float32),
      beta.reshape(1, D).astype(jnp.float32))
    return out[:M] if Mp != M else out


def _attn_kernel(qkv_ref, m_ref, x_ref, ow_ref, ob_ref, o_ref, *, n_head, scale):
    # One batch element per grid step; all heads handled in-kernel so q/k/v and
    # the attention output stay in [T, n_state] layout (no HBM transposes).
    # Output projection and residual add are fused so only the post-attention
    # residual stream is written back to HBM.
    _, T, D3 = qkv_ref.shape
    D = D3 // 3
    Dh = D // n_head
    mask = m_ref[0]                                        # [T, T] additive
    outs = []
    for h in range(n_head):                                # static unroll
        s = h * Dh
        qh = qkv_ref[0, :, s:s + Dh].astype(jnp.float32)           # [T, Dh]
        kh = qkv_ref[0, :, D + s:D + s + Dh].astype(jnp.float32)
        vh = qkv_ref[0, :, 2 * D + s:2 * D + s + Dh].astype(jnp.float32)
        qk = jax.lax.dot_general(qh, kh, (((1,), (1,)), ((), ())),
                                 preferred_element_type=jnp.float32) * scale
        qk = qk + mask
        mx = jnp.max(qk, axis=-1, keepdims=True)
        p = jnp.exp(qk - mx)
        inv = pl.reciprocal(jnp.sum(p, axis=-1, keepdims=True), approx=True)
        outs.append(jnp.dot(p * inv, vh, preferred_element_type=jnp.float32))
    wv = jnp.concatenate(outs, axis=-1)                    # [T, D] lane-dense
    y = jnp.dot(wv.astype(MATMUL_DTYPE), ow_ref[...].astype(MATMUL_DTYPE),
                preferred_element_type=jnp.float32) + ob_ref[...]
    o_ref[0] = (x_ref[0].astype(jnp.float32) + y).astype(o_ref.dtype)


def attention_block_pallas(qkv, x, mask, o_w, o_b, n_head, scale):
    """Fused (multi-head attention -> out-proj -> +residual).
    qkv: [B, T, 3D] packed; x: [B, T, D] residual stream;
    mask: [B, T, T] (per-batch) or [1, T, T] (shared causal) additive f32;
    o_w: [D, D] pre-transposed, o_b: [D]."""
    # TODO(synk): flash-style online-softmax with a KV-block grid axis for long
    # contexts (current kernel keeps the full T x T scores in VMEM per head).
    B, T, D3 = qkv.shape
    D = D3 // 3
    mask_map = (lambda b: (b, 0, 0)) if mask.shape[0] == B else (lambda b: (0, 0, 0))
    kernel = functools.partial(_attn_kernel, n_head=n_head, scale=scale)
    return pl.pallas_call(
        kernel,
        out_shape=jax.ShapeDtypeStruct((B, T, D), x.dtype),
        grid=(B,),
        in_specs=[pl.BlockSpec((1, T, D3), lambda b: (b, 0, 0)),
                  pl.BlockSpec((1, T, T), mask_map),
                  pl.BlockSpec((1, T, D), lambda b: (b, 0, 0)),
                  pl.BlockSpec((D, D), lambda b: (0, 0)),
                  pl.BlockSpec((1, D), lambda b: (0, 0))],
        out_specs=pl.BlockSpec((1, T, D), lambda b: (b, 0, 0)),
        compiler_params=pltpu.CompilerParams(dimension_semantics=("parallel",)),
    )(qkv, mask.astype(jnp.float32), x, o_w, o_b.reshape(1, D).astype(jnp.float32))


# ----------------------------- model (glue + kernels) -----------------------------

def attention_mask_jax(loss_mask, prefix_lm=True):
    """JAX port of attention_mask(); returns bool [B, L, L], True = can attend.
    (Like the PyTorch reference, a fully-False loss_mask row is unsupported.)"""
    B, L = loss_mask.shape
    axis = jnp.arange(L, dtype=jnp.int32)
    start = jnp.min(jnp.where(loss_mask, axis[None, :], 100000000), axis=1)
    end = jnp.max(jnp.where(loss_mask, axis[None, :], -100000000), axis=1)
    mask = jnp.broadcast_to((axis[:, None] >= axis[None, :])[None, :, :], (B, L, L))
    if prefix_lm:
        mask = jnp.where(start.reshape(B, 1, 1) > axis.reshape(1, 1, L), True, mask)
    mask = jnp.where(end.reshape(B, 1, 1) < axis.reshape(1, 1, L), False, mask)
    return mask


def residual_block(x, p, mask, n_head):
    B, T, D = x.shape
    x2 = x.reshape(B * T, D)
    # Fused attn_ln + Q/K/V projection (key bias is identically zero == no bias).
    qkv = linear_pallas(x2, p["qkv_w"], p["qkv_b"],
                        ln=(p["attn_ln_w"], p["attn_ln_b"]))          # [B*T, 3D]
    # (Dh ** -0.25 applied to both q and k) == Dh ** -0.5 applied to the scores.
    scale = float(D // n_head) ** -0.5
    # Fused attention + out-proj + residual add.
    x = attention_block_pallas(qkv.reshape(B, T, 3 * D), x, mask,
                               p["o_w"], p["o_b"], n_head, scale)     # [B, T, D]
    # Fused mlp_ln + MLP-up + GELU, then MLP-down fused with the residual add.
    x2 = x.reshape(B * T, D)
    h = linear_pallas(x2, p["mlp_w1"], p["mlp_b1"],
                      ln=(p["mlp_ln_w"], p["mlp_ln_b"]), activation="gelu")
    x2 = linear_pallas(h, p["mlp_w2"], p["mlp_b2"], residual=x2)
    return x2.reshape(B, T, D)


def global_forward(params, cfg, x, mask):
    na = cfg["na_repeat"]
    B, L = x.shape
    T = L // na
    if cfg["prefix_lm"]:
        vis = attention_mask_jax(mask[:, ::na], prefix_lm=True)       # [B,T,T]
        attn_mask = jnp.where(vis, 0.0, -jnp.inf).astype(jnp.float32)
    else:
        attn_mask = params["causal_mask"][:T, :T][None]               # [1,T,T]
    # TODO(synk): embedding gather stays in XLA (jnp.take); a scalar-prefetch
    # Pallas gather is not worthwhile at these sizes.
    h = jnp.take(params["g_emb"], x, axis=0).reshape(B, T, -1)
    h = h + params["g_pos"][:T][None]
    for lp in params["g_layers"]:
        h = residual_block(h, lp, attn_mask, cfg["n_head"])
    D = h.shape[-1]
    h2 = h.reshape(B * T, D)
    if na == 1:
        # Fused final g_ln + g2l projection (feature dims match when na == 1).
        h = linear_pallas(h2, params["g2l_w"], params["g2l_b"],
                          ln=(params["g_ln_w"], params["g_ln_b"]))
    else:
        h2 = layernorm_pallas(h2, params["g_ln_w"], params["g_ln_b"])
        h = linear_pallas(h2.reshape(B * T * na, D // na),
                          params["g2l_w"], params["g2l_b"])
    return h.reshape(B * T, na, -1)


def local_forward(params, cfg, x, global_logits):
    Bp, Tp = x.shape                               # Bp = B*T, Tp = na_repeat
    D = params["l_emb"].shape[1]
    causal = params["causal_mask"][:Tp, :Tp][None]                    # [1,Tp,Tp]
    h = jnp.take(params["l_emb"], x, axis=0) + global_logits + params["l_pos"][:Tp][None]
    for lp in params["l_layers"]:
        h = residual_block(h, lp, causal, cfg["n_head"])
    # Fused final l_ln + lm_head projection (lm_head has no bias).
    logits = linear_pallas(h.reshape(Bp * Tp, D), params["lm_head_w"], None,
                           ln=(params["l_ln_w"], params["l_ln_b"]))
    return logits.reshape(Bp, Tp, -1)


def megabyte_forward(params, cfg, x, mask):
    # TODO(synk): kv_cache / conti_segs / continuous_mappings branches are not
    # exercised by the default training forward (None inputs) and are omitted.
    na = cfg["na_repeat"]
    B, L = x.shape
    T = L // na
    x_global = jnp.concatenate(
        [jnp.full_like(x[:, :na], cfg["global_sos"]), x[:, :-na]], axis=-1)
    mask_shift = jnp.concatenate(
        [jnp.zeros_like(mask[:, :na]), mask[:, :-na]], axis=-1)
    g = global_forward(params, cfg, x_global, mask_shift)      # [B*T, na, n_state]
    xr = x.reshape(B * T, na)
    x_local = jnp.concatenate(
        [jnp.full_like(xr[:, :1], cfg["local_sos"]), xr[:, :-1]], axis=-1)
    logits = local_forward(params, cfg, x_local, g)            # [B*T, na, n_vocab]
    return logits.reshape(B, T * na, -1)


# ----------------------------- parameter init -----------------------------

def init_params(key, cfg):
    n_vocab, n_ctx, n_state = cfg["n_vocab"], cfg["n_ctx"], cfg["n_state"]
    na, n_layer = cfg["na_repeat"], cfg["n_layer"]
    n_local_layer = min(8, n_layer // 2)

    keys = iter(jax.random.split(key, 64 + 16 * (n_layer + n_local_layer)))

    def nrm(shape):
        return 0.02 * jax.random.normal(next(keys), shape, jnp.float32)

    def block_params(D):
        # Weights are stored pre-transposed ([in, out]); Q/K/V are fused into a
        # single [D, 3D] projection (key's missing bias represented by zeros).
        return {
            "qkv_w": nrm((D, 3 * D)),
            "qkv_b": jnp.zeros((3 * D,), jnp.float32),
            "o_w": nrm((D, D)), "o_b": jnp.zeros((D,), jnp.float32),
            "attn_ln_w": jnp.ones((D,), jnp.float32),
            "attn_ln_b": jnp.zeros((D,), jnp.float32),
            "mlp_w1": nrm((D, 4 * D)), "mlp_b1": jnp.zeros((4 * D,), jnp.float32),
            "mlp_w2": nrm((4 * D, D)), "mlp_b2": jnp.zeros((D,), jnp.float32),
            "mlp_ln_w": jnp.ones((D,), jnp.float32),
            "mlp_ln_b": jnp.zeros((D,), jnp.float32),
        }

    return {
        "g_emb": nrm((n_vocab, n_state // na)),
        "g_pos": nrm((n_ctx, n_state)),
        "g_layers": [block_params(n_state) for _ in range(n_layer)],
        "g_ln_w": jnp.ones((n_state,), jnp.float32),
        "g_ln_b": jnp.zeros((n_state,), jnp.float32),
        "l_emb": nrm((n_vocab, n_state)),
        "l_pos": nrm((na, n_state)),
        "l_layers": [block_params(n_state) for _ in range(n_local_layer)],
        "l_ln_w": jnp.ones((n_state,), jnp.float32),
        "l_ln_b": jnp.zeros((n_state,), jnp.float32),
        "g2l_w": nrm((n_state // na, n_state)),       # pre-transposed [in, out]
        "g2l_b": jnp.zeros((n_state,), jnp.float32),
        "lm_head_w": nrm((n_state, n_vocab)),         # pre-transposed, no bias
        "causal_mask": jnp.triu(
            jnp.full((n_ctx, n_ctx), -jnp.inf, jnp.float32), k=1),
    }


# ----------------------------- main -----------------------------

if __name__ == "__main__":
    cfg = dict(n_vocab=32, n_ctx=16, n_state=32, n_head=4, n_layer=2,
               prefix_lm=True, na_repeat=1, local_sos=24, global_sos=23)
    key = jax.random.PRNGKey(0)
    pkey, xkey = jax.random.split(key)
    params = init_params(pkey, cfg)

    B, L = 2, 8                                   # L // na_repeat < n_ctx
    x = jax.random.randint(xkey, (B, L), 0, cfg["n_vocab"], dtype=jnp.int32)
    # loss mask: one contiguous target span per sequence (attention_mask requires it)
    pos = jnp.arange(L)
    mask = jnp.stack([(pos >= 2) & (pos <= 5),
                      (pos >= 1) & (pos <= 6)], axis=0)

    logits = megabyte_forward(params, cfg, x, mask)
    logits = jax.block_until_ready(logits)
    assert logits.shape == (B, L, cfg["n_vocab"]), logits.shape
    assert bool(jnp.all(jnp.isfinite(logits)))
    print("KERNEL_OK")
</pallas_src>

<mosaic_0001>
module attributes {stable_mosaic.version = 11 : i64} {
  func.func @kernel(%arg0: i32, %arg1: i32, %arg2: memref<16x32xf32, #tpu.memory_space<vmem>>, %arg3: memref<1x32xf32, #tpu.memory_space<vmem>>, %arg4: memref<1x32xf32, #tpu.memory_space<vmem>>, %arg5: memref<32x96xf32, #tpu.memory_space<vmem>>, %arg6: memref<1x96xf32, #tpu.memory_space<vmem>>, %arg7: memref<16x96xf32, #tpu.memory_space<vmem>>) attributes {dimension_semantics = [#tpu.dimension_semantics<parallel>, #tpu.dimension_semantics<parallel>], iteration_bounds = array<i64: 1, 1>, scalar_prefetch = 0 : i64, scratch_operands = 0 : i64, tpu.core_type = #tpu.core_type<tc>, window_params = [{transform_indices = @transform_0, window_bounds = array<i64: 16, 32>}, {pipeline_mode = #tpu.pipeline_mode<synchronous>, transform_indices = @transform_1, window_bounds = array<i64: 1, 32>}, {pipeline_mode = #tpu.pipeline_mode<synchronous>, transform_indices = @transform_2, window_bounds = array<i64: 1, 32>}, {transform_indices = @transform_3, window_bounds = array<i64: 32, 96>}, {transform_indices = @transform_4, window_bounds = array<i64: 1, 96>}, {transform_indices = @transform_5, window_bounds = array<i64: 16, 96>}]} {
    %c0 = arith.constant 0 : index
    %c0_0 = arith.constant 0 : index
    %0 = vector.load %arg2[%c0, %c0_0] : memref<16x32xf32, #tpu.memory_space<vmem>>, vector<16x32xf32>
    %cst = arith.constant dense<0.000000e+00> : vector<16xf32>
    %1 = vector.multi_reduction <add>, %0, %cst [1] : vector<16x32xf32> to vector<16xf32>
    %2 = vector.shape_cast %1 : vector<16xf32> to vector<16x1xf32>
    %cst_1 = arith.constant 3.200000e+01 : f32
    %3 = vector.broadcast %cst_1 : f32 to vector<16x1xf32>
    %4 = arith.divf %2, %3 : vector<16x1xf32>
    %5 = vector.broadcast %4 : vector<16x1xf32> to vector<16x32xf32>
    %6 = arith.subf %0, %5 : vector<16x32xf32>
    %7 = arith.mulf %6, %6 : vector<16x32xf32>
    %cst_2 = arith.constant dense<0.000000e+00> : vector<16xf32>
    %8 = vector.multi_reduction <add>, %7, %cst_2 [1] : vector<16x32xf32> to vector<16xf32>
    %9 = vector.shape_cast %8 : vector<16xf32> to vector<16x1xf32>
    %cst_3 = arith.constant 3.200000e+01 : f32
    %10 = vector.broadcast %cst_3 : f32 to vector<16x1xf32>
    %11 = arith.divf %9, %10 : vector<16x1xf32>
    %12 = vector.broadcast %4 : vector<16x1xf32> to vector<16x32xf32>
    %13 = arith.subf %0, %12 : vector<16x32xf32>
    %cst_4 = arith.constant 9.99999974E-6 : f32
    %14 = vector.broadcast %cst_4 : f32 to vector<16x1xf32>
    %15 = arith.addf %11, %14 : vector<16x1xf32>
    %16 = math.rsqrt %15 : vector<16x1xf32>
    %17 = vector.broadcast %16 : vector<16x1xf32> to vector<16x32xf32>
    %18 = arith.mulf %13, %17 : vector<16x32xf32>
    %c0_5 = arith.constant 0 : index
    %c0_6 = arith.constant 0 : index
    %19 = vector.load %arg3[%c0_5, %c0_6] : memref<1x32xf32, #tpu.memory_space<vmem>>, vector<1x32xf32>
    %20 = vector.broadcast %19 : vector<1x32xf32> to vector<16x32xf32>
    %21 = arith.mulf %18, %20 : vector<16x32xf32>
    %c0_7 = arith.constant 0 : index
    %c0_8 = arith.constant 0 : index
    %22 = vector.load %arg4[%c0_7, %c0_8] : memref<1x32xf32, #tpu.memory_space<vmem>>, vector<1x32xf32>
    %23 = vector.broadcast %22 : vector<1x32xf32> to vector<16x32xf32>
    %24 = arith.addf %21, %23 : vector<16x32xf32>
    %c0_9 = arith.constant 0 : index
    %c0_10 = arith.constant 0 : index
    %25 = vector.load %arg5[%c0_9, %c0_10] : memref<32x96xf32, #tpu.memory_space<vmem>>, vector<32x96xf32>
    %cst_11 = arith.constant dense<0.000000e+00> : vector<16x96xf32>
    %26 = tpu.matmul %24, %25, %cst_11 {dimension_numbers = #tpu.dot_dimension_numbers<[1], [0], [0], [1], [0, 0, 1, 1], [], []>} : vector<16x32xf32>, vector<32x96xf32>, vector<16x96xf32> -> vector<16x96xf32>
    %c0_12 = arith.constant 0 : index
    %c0_13 = arith.constant 0 : index
    %27 = vector.load %arg6[%c0_12, %c0_13] : memref<1x96xf32, #tpu.memory_space<vmem>>, vector<1x96xf32>
    %28 = vector.broadcast %27 : vector<1x96xf32> to vector<16x96xf32>
    %29 = arith.addf %26, %28 : vector<16x96xf32>
    %c0_14 = arith.constant 0 : index
    %c0_15 = arith.constant 0 : index
    %30 = vector.load %arg7[%c0_14, %c0_15] : memref<16x96xf32, #tpu.memory_space<vmem>>, vector<16x96xf32>
    tpu.vector_store %arg7[%c0_14, %c0_15], %29 {strides = array<i32>} : memref<16x96xf32, #tpu.memory_space<vmem>>, vector<16x96xf32>,
    return
  }
  func.func @transform_0(%arg0: i32, %arg1: i32) -> (i32, i32) {
    %c0_i32 = arith.constant 0 : i32
    %c0_i32_0 = arith.constant 0 : i32
    return %arg0, %c0_i32 : i32, i32
  }
  func.func @transform_1(%arg0: i32, %arg1: i32) -> (i32, i32) {
    %c0_i32 = arith.constant 0 : i32
    %c0_i32_0 = arith.constant 0 : i32
    %c0_i32_1 = arith.constant 0 : i32
    return %c0_i32, %c0_i32_0 : i32, i32
  }
  func.func @transform_2(%arg0: i32, %arg1: i32) -> (i32, i32) {
    %c0_i32 = arith.constant 0 : i32
    %c0_i32_0 = arith.constant 0 : i32
    %c0_i32_1 = arith.constant 0 : i32
    return %c0_i32, %c0_i32_0 : i32, i32
  }
  func.func @transform_3(%arg0: i32, %arg1: i32) -> (i32, i32) {
    %c0_i32 = arith.constant 0 : i32
    %c0_i32_0 = arith.constant 0 : i32
    return %c0_i32, %arg1 : i32, i32
  }
  func.func @transform_4(%arg0: i32, %arg1: i32) -> (i32, i32) {
    %c0_i32 = arith.constant 0 : i32
    %c0_i32_0 = arith.constant 0 : i32
    return %c0_i32, %arg1 : i32, i32
  }
  func.func @transform_5(%arg0: i32, %arg1: i32) -> (i32, i32) {
    %c0_i32 = arith.constant 0 : i32
    return %arg0, %arg1 : i32, i32
  }
}

</mosaic_0001>

<llo_original>
// kernel: tpu_custom_call.1
$region0: #{tpu_custom_call.1}
  #allocation0 [shape = 'u32[]', space=smem, size = 0x4, offset = 0x4, fixed_abs, tag = 'smem constant byte address 0x4 - core index']
  #allocation1 [shape = 'u32[144,128]{1,0:T(1,128)}', space=vmem, size = 0x12000, scoped, tag = 'internal scratch']
  %s0 = inlined_call_operand.hbm [shape: f32[16,32], index: 0, kind: input, shape index: {}]
  %s1 = inlined_call_operand.vmem [shape: f32[1,32], index: 1, kind: input, shape index: {}]
  %s2 = inlined_call_operand.vmem [shape: f32[1,32], index: 2, kind: input, shape index: {}]
  %s3 = inlined_call_operand.hbm [shape: f32[32,96], index: 3, kind: input, shape index: {}]
  %s4 = inlined_call_operand.vmem [shape: f32[1,96], index: 4, kind: input, shape index: {}]
  %s5 = inlined_call_operand.hbm [shape: f32[16,96], index: 5, kind: output, shape index: {}]
  %s6 = sld [smem:[#allocation0]]
  $region38: #{tpu_custom_call.1} parent=0
    _
  %s8 = ssub.s32 1, %s6
  %s9 = scalar_select 0, %s8, %s6
  $region1: #{tpu_custom_call.1} parent=0
    #allocation2 [shape = 'u8[8192]{0}', space=vmem, size = 0x2000, scoped, tag = 'input window, operand 0, single buffered']
    #allocation3 [shape = 's32[1]{0}', space=sflag, size = 0x4, scoped, tag = 'scoped memory for tpu_custom_call.1']
    #allocation4 [shape = 's32[1]{0}', space=sflag, size = 0x4, scoped, tag = 'scoped memory for tpu_custom_call.1']
    #allocation5 [shape = 'u8[16384]{0}', space=vmem, size = 0x4000, scoped, tag = 'input window, operand 3, single buffered']
    #allocation6 [shape = 's32[1]{0}', space=sflag, size = 0x4, scoped, tag = 'scoped memory for tpu_custom_call.1']
    #allocation7 [shape = 'u8[8192]{0}', space=vmem, size = 0x2000, scoped, tag = 'output window, operand 0, single buffered']
    %10 = vsyncpa [#allocation3], 0
    %11 = vsyncpa [#allocation6], 0
    %12 = vsyncpa [#allocation4], 0
    // Predicated region
    $region2: #{tpu_custom_call.1} parent=1 // pred_check
      _
    $region3: #{tpu_custom_call.1} parent=1 // pred_check_branch
      %14 = sbr.rel (0) target = $region5
    $region4: #{tpu_custom_call.1} parent=1 // pred_region
      %s16 = ssub.s32 256, 256
      %17 = vsyncadd [#allocation3], %s16
      %s18 = sshll.u32 [#allocation2], 4
      %s19 = int_to_ptr.vmem [resolvable:$true] %s18
      %24 = dma.hbm_to_vmem [thread:$0]  %s0, 256, %s19, [#allocation3], 128, 128, 8
    $region5: #{tpu_custom_call.1} parent=1 // pred_fallthru
      _
    // Predicated region
    $region6: #{tpu_custom_call.1} parent=1 // pred_check
      _
    $region7: #{tpu_custom_call.1} parent=1 // pred_check_branch
      %26 = sbr.rel (0) target = $region9
    $region8: #{tpu_custom_call.1} parent=1 // pred_region
      _
    $region9: #{tpu_custom_call.1} parent=1 // pred_fallthru
      _
    // Predicated region
    $region10: #{tpu_custom_call.1} parent=1 // pred_check
      _
    $region11: #{tpu_custom_call.1} parent=1 // pred_check_branch
      %28 = sbr.rel (0) target = $region13
    $region12: #{tpu_custom_call.1} parent=1 // pred_region
      _
    $region13: #{tpu_custom_call.1} parent=1 // pred_fallthru
      _
    // Predicated region
    $region14: #{tpu_custom_call.1} parent=1 // pred_check
      _
    $region15: #{tpu_custom_call.1} parent=1 // pred_check_branch
      %30 = sbr.rel (0) target = $region17
    $region16: #{tpu_custom_call.1} parent=1 // pred_region
      %s32 = ssub.s32 512, 512
      %33 = vsyncadd [#allocation6], %s32
      %s34 = sshll.u32 [#allocation5], 4
      %s35 = int_to_ptr.vmem [resolvable:$true] %s34
      %40 = dma.hbm_to_vmem [thread:$0]  %s3, 512, %s35, [#allocation6], 128, 128, 8
    $region17: #{tpu_custom_call.1} parent=1 // pred_fallthru
      _
    // Predicated region
    $region18: #{tpu_custom_call.1} parent=1 // pred_check
      _
    $region19: #{tpu_custom_call.1} parent=1 // pred_check_branch
      %42 = sbr.rel (0) target = $region21
    $region20: #{tpu_custom_call.1} parent=1 // pred_region
      _
    $region21: #{tpu_custom_call.1} parent=1 // pred_fallthru
      _
    // Predicated region
    $region22: #{tpu_custom_call.1} parent=1 // pred_check
      _
    $region23: #{tpu_custom_call.1} parent=1 // pred_check_branch
      %44 = sbr.rel (0) target = $region25
    $region24: #{tpu_custom_call.1} parent=1 // pred_region
      %45 = dma.done [#allocation3], 256
    $region25: #{tpu_custom_call.1} parent=1 // pred_fallthru
      _
    // Predicated region
    $region26: #{tpu_custom_call.1} parent=1 // pred_check
      _
    $region27: #{tpu_custom_call.1} parent=1 // pred_check_branch
      %47 = sbr.rel (0) target = $region29
    $region28: #{tpu_custom_call.1} parent=1 // pred_region
      %48 = dma.done [#allocation6], 512
    $region29: #{tpu_custom_call.1} parent=1 // pred_fallthru
      _
    %v49 = vld [vmem:[#allocation2] sm:$0xff]
    %v50 = vld [vmem:[#allocation2 + $0x8] sm:$0xff]
    %vm51 = vcmask 261120
    %v52 = vsel %vm51, %v49, 0.0
    %53 = vadd.xlane.f32.xlu0 %v52
    %v54 = vpop.xlane.xlu0 %53
    %v55 = vsel %vm51, %v50, 0.0
    %56 = vadd.xlane.f32.xlu0 %v55
    %v57 = vpop.xlane.xlu0 %56
    %v58 = vrcp.pop 32.0
    %v59 = vmul.f32 %v54, %v58
    %v60 = vmul.f32 %v57, %v58
    %v61 = vsub.f32 %v49, %v59
    %v62 = vsub.f32 %v50, %v60
    %v63 = vmul.f32 %v61, %v61
    %v64 = vmul.f32 %v62, %v62
    %v65 = vsel %vm51, %v63, 0.0
    %66 = vadd.xlane.f32.xlu0 %v65
    %v67 = vpop.xlane.xlu0 %66
    %v68 = vsel %vm51, %v64, 0.0
    %69 = vadd.xlane.f32.xlu0 %v68
    %v70 = vpop.xlane.xlu0 %69
    %v71 = vmul.f32 %v67, %v58
    %v72 = vmul.f32 %v70, %v58
    %v73 = vadd.f32 %v71, 1e-05
    %v74 = vadd.f32 %v72, 1e-05
    %v75 = vrsqrt.pop %v73
    %v76 = vrsqrt.pop %v74
    %v77 = vmul.f32 %v61, %v75
    %v78 = vmul.f32 %v62, %v76
    %v79 = vld [vmem:[%s1] sm:$0x1]
    %v81 = vlaneseq
    %v82 = vshrl.u32 %v81, 7
    %v83 = vsub.s32 0, %v82
    %v84 = vrot.slane %v79, %v83
    %v86 = vmul.f32 %v77, %v84
    %v87 = vmul.f32 %v78, %v84
    %v88 = vld [vmem:[%s2] sm:$0x1]
    %v90 = vlaneseq
    %v91 = vshrl.u32 %v90, 7
    %v92 = vsub.s32 0, %v91
    %v93 = vrot.slane %v88, %v92
    %v95 = vadd.f32 %v86, %v93
    %v96 = vadd.f32 %v87, %v93
    %v97 = vld [vmem:[#allocation5] sm:$0xff]
    %v98 = vld [vmem:[#allocation5 + $0x8] sm:$0xff]
    %v99 = vld [vmem:[#allocation5 + $0x10] sm:$0xff]
    %v100 = vld [vmem:[#allocation5 + $0x18] sm:$0xff]
    %v101 = vld [vmem:[%s4] sm:$0x1]
    %v103 = vlaneseq
    %v104 = vshrl.u32 %v103, 7
    %v105 = vsub.s32 0, %v104
    %v106 = vrot.slane %v101, %v105
    %v109 = vsel %vm51, %v95, 0
    %v112 = vsel %vm51, %v96, 0
    %114 = vmatprep.subr.mxu0 0.0
    %115 = vmatpush1.msra.mxu0 0.0
    %116 = vmatprep.subr.mxu0 0.0
    %117 = vmatpush1.msra.mxu0 0.0
    %118 = vmatprep.subr.mxu0 0.0
    %119 = vmatpush1.msra.mxu0 0.0
    %120 = vmatprep.subr.mxu0 0.0
    %121 = vmatpush1.msra.mxu0 0.0
    %122 = vmatprep.subr.mxu0 0.0
    %123 = vmatpush1.msra.mxu0 0.0
    %124 = vmatprep.subr.mxu0 0.0
    %125 = vmatpush1.msra.mxu0 0.0
    %126 = vmatprep.subr.mxu0 0.0
    %127 = vmatpush1.msra.mxu0 0.0
    %128 = vmatprep.subr.mxu0 0.0
    %129 = vmatpush1.msra.mxu0 0.0
    %130 = vmatprep.subr.mxu0 0.0
    %131 = vmatpush1.msra.mxu0 0.0
    %132 = vmatprep.subr.mxu0 0.0
    %133 = vmatpush1.msra.mxu0 0.0
    %134 = vmatprep.subr.mxu0 0.0
    %135 = vmatpush1.msra.mxu0 0.0
    %136 = vmatprep.subr.mxu0 0.0
    %137 = vmatpush1.msra.mxu0 0.0
    %138 = vmatprep.subr.mxu0 0.0
    %139 = vmatpush1.msra.mxu0 %v100
    %140 = vmatprep.subr.mxu0 0.0
    %141 = vmatpush1.msra.mxu0 %v99
    %142 = vmatprep.subr.mxu0 0.0
    %143 = vmatpush1.msra.mxu0 %v98
    %144 = vmatprep.subr.mxu0 0.0
    %145 = vmatpush1.msra.mxu0 %v97
    %146 = vmatprep.subr.mxu0 0.0
    %147 = vmatpush2.msra.mxu0 0.0
    %148 = vmatprep.subr.mxu0 0.0
    %149 = vmatpush2.msra.mxu0 0.0
    %150 = vmatprep.subr.mxu0 0.0
    %151 = vmatpush2.msra.mxu0 0.0
    %152 = vmatprep.subr.mxu0 0.0
    %153 = vmatpush2.msra.mxu0 0.0
    %154 = vmatprep.subr.mxu0 0.0
    %155 = vmatpush2.msra.mxu0 0.0
    %156 = vmatprep.subr.mxu0 0.0
    %157 = vmatpush2.msra.mxu0 0.0
    %158 = vmatprep.subr.mxu0 0.0
    %159 = vmatpush2.msra.mxu0 0.0
    %160 = vmatprep.subr.mxu0 0.0
    %161 = vmatpush2.msra.mxu0 0.0
    %162 = vmatprep.subr.mxu0 0.0
    %163 = vmatpush2.msra.mxu0 0.0
    %164 = vmatprep.subr.mxu0 0.0
    %165 = vmatpush2.msra.mxu0 0.0
    %166 = vmatprep.subr.mxu0 0.0
    %167 = vmatpush2.msra.mxu0 0.0
    %168 = vmatprep.subr.mxu0 0.0
    %169 = vmatpush2.msra.mxu0 0.0
    %170 = vmatprep.subr.mxu0 0.0
    %171 = vmatpush2.msra.mxu0 0.0
    %172 = vmatprep.subr.mxu0 0.0
    %173 = vmatpush2.msra.mxu0 0.0
    %174 = vmatprep.subr.mxu0 0.0
    %175 = vmatpush2.msra.mxu0 0.0
    %176 = vmatprep.subr.mxu0 0.0
    %177 = vmatpush2.msra.mxu0 0.0
    %178 = vmatprep.mubr.f32.mxu0 0.0
    %179 = vmatmul.mubr.f32.gmra.mxu0 %v109
    %v180 = vpop.f32.mrf.mxu0
    %v181 = vadd.f32 %v106, %v180
    %v182 = vpop.f32.mrf.mxu0
    %183 = vmatprep.mubr.f32.mxu0 0.0
    %184 = vmatmul.mubr.f32.gmra.mxu0 %v112
    %v185 = vpop.f32.mrf.mxu0
    %v186 = vadd.f32 %v106, %v185
    %v187 = vpop.f32.mrf.mxu0
    %188 = vdwg.mxu0
    %vm189 = vcmask 785408
    %190 = vst.msk [vmem:[#allocation7] sm:$0xff] %vm189, %v181
    %191 = vst.msk [vmem:[#allocation7 + $0x8] sm:$0xff] %vm189, %v186
    // Predicated region
    $region30: #{tpu_custom_call.1} parent=1 // pred_check
      _
    $region31: #{tpu_custom_call.1} parent=1 // pred_check_branch
      %193 = sbr.rel (0) target = $region33
    $region32: #{tpu_custom_call.1} parent=1 // pred_region
      %s195 = ssub.s32 256, 256
      %196 = vsyncadd [#allocation4], %s195
      %s197 = sshll.u32 [#allocation7], 4
      %s198 = int_to_ptr.vmem [resolvable:$true] %s197
      %203 = dma.vmem_to_hbm [thread:$0]  %s198, 256, %s5, [#allocation4], 128, 128, 8
    $region33: #{tpu_custom_call.1} parent=1 // pred_fallthru
      _
    // Predicated region
    $region34: #{tpu_custom_call.1} parent=1 // pred_check
      _
    $region35: #{tpu_custom_call.1} parent=1 // pred_check_branch
      %205 = sbr.rel (0) target = $region37
    $region36: #{tpu_custom_call.1} parent=1 // pred_region
      %206 = dma.done [#allocation4], 256
    $region37: #{tpu_custom_call.1} parent=1 // pred_fallthru
      _
    %207 = vsyncpa [#allocation3], 1
    %208 = vsyncpa [#allocation6], 1
    %209 = vsyncpa [#allocation4], 1

</llo_original>
